<compile_context>
chip_gen: v6e
topology: v6e:2x2x1
jax: 0.10.0
libtpu: 0.0.40
codegen_flags: <defaults>
</compile_context>

<pallas_src>
import functools

import jax
import jax.numpy as jnp
import numpy as np
from jax.experimental import pallas as pl
from jax.experimental.pallas import tpu as pltpu


def _make_kernel(tb, c_in, c_out):
    def kernel(x_ref, w_ref, s_ref, o_ref):
        # x_ref: (tb*c_in, H*W)  tb images, channel-major rows, flattened NCHW pixels
        # w_ref: (c_out, c_in)   1x1-conv weight   (constant block index -> resident)
        # s_ref: (H*W, P)        0/1 subsample-selection matrix (constant -> resident)
        # o_ref: (tb*c_out, P)   flattened-NCHW output rows, P = Ho*Wo
        #
        # Spatial subsample as an exact MXU gather: each column of S has a single 1.0,
        # so xs[r, p] == x[r, src(p)] bit-exactly in the input dtype.
        xs = jnp.dot(x_ref[...], s_ref[...])              # (tb*c_in, P)
        # Per-image 1x1 "conv" = channel matmul, f32 accumulation on the MXU.
        for t in range(tb):                               # short static unroll (tb <= 8)
            o_ref[pl.ds(t * c_out, c_out), :] = jnp.dot(
                w_ref[...],
                xs[t * c_in:(t + 1) * c_in, :],
                preferred_element_type=jnp.float32,
            ).astype(o_ref.dtype)

    return kernel


def _pick_images_per_step(batch, c_in, c_out, hw, p, itemsize):
    """Images per grid step: big tiles, >=2 steps (v7x megacore), sublane-legal blocks."""
    per_image_bytes = (c_in * hw + c_out * p) * itemsize
    vmem_cap = max(1, (4 << 20) // max(per_image_bytes, 1))   # ~4 MiB/step before buffering
    if batch >= 8:
        target_steps = 8
    elif batch >= 2:
        target_steps = 2          # keep at least two blocks so both v7x TCs get work
    else:
        target_steps = 1
    want = max(1, min(batch // target_steps, vmem_cap, 8))
    for tb in range(want, 0, -1):
        # Blocks (tb*C_in, HW) / (tb*C_out, P): second-to-last dim must be a multiple of 8
        # unless it equals the full extent -> enforce %8 here, fall back to full-extent below.
        if batch % tb == 0 and (tb * c_in) % 8 == 0 and (tb * c_out) % 8 == 0:
            return tb
    return batch   # full-extent blocks are always legal (grid collapses to one step)


@functools.partial(jax.jit, static_argnames=("stride",))
def downsample_c_forward(x_nchw, weight_oihw, *, stride):
    """DownsampleC.forward.  x:(B,C_in,H,W), weight:(C_out,C_in,1,1) -> (B,C_out,Ho,Wo).

    Computes in the input dtype with f32 accumulation (pass bf16 inputs for the fast path).
    """
    B, C_in, H, W = x_nchw.shape
    C_out = weight_oihw.shape[0]
    Ho = (H - 1) // stride + 1
    Wo = (W - 1) // stride + 1
    HW, P = H * W, Ho * Wo
    dtype = x_nchw.dtype
    itemsize = np.dtype(dtype).itemsize

    # --- zero-copy re-views (pure metadata; no HBM traffic, unlike the old x_sub/x_rows) ---
    x_rows = x_nchw.reshape(B * C_in, HW)
    w = weight_oihw.reshape(C_out, C_in).astype(dtype)

    # --- subsample-selection matrix, built in numpy at trace time (a jit constant) ---------
    # S[hw, p] = 1  iff  hw == (p // Wo) * stride * W + (p % Wo) * stride
    p_idx = np.arange(P)
    src = (p_idx // Wo) * (stride * W) + (p_idx % Wo) * stride
    s_np = np.zeros((HW, P), dtype=np.float32)
    s_np[src, p_idx] = 1.0
    s_mat = jnp.asarray(s_np, dtype=dtype)

    tb = _pick_images_per_step(B, C_in, C_out, HW, P, itemsize)
    grid = (B // tb,)

    flops = 2 * B * C_in * P * (HW + C_out)          # gather matmul + channel matmul
    bytes_accessed = itemsize * (B * C_in * HW + C_out * C_in + HW * P + B * C_out * P)

    out_rows = pl.pallas_call(
        _make_kernel(tb, C_in, C_out),
        out_shape=jax.ShapeDtypeStruct((B * C_out, P), dtype),
        grid=grid,
        in_specs=[
            pl.BlockSpec((tb * C_in, HW), lambda i: (i, 0)),
            # Constant block indices -> fetched once, kept resident across the whole grid.
            # (pipeline_mode=pl.Buffered(1) would shave one spare buffer; left at default.)
            pl.BlockSpec((C_out, C_in), lambda i: (0, 0)),
            pl.BlockSpec((HW, P), lambda i: (0, 0)),
        ],
        out_specs=pl.BlockSpec((tb * C_out, P), lambda i: (i, 0)),
        compiler_params=pltpu.CompilerParams(
            dimension_semantics=("parallel",),       # independent image groups -> megacore
        ),
        cost_estimate=pl.CostEstimate(
            flops=flops, transcendentals=0, bytes_accessed=bytes_accessed
        ),
    )(x_rows, w, s_mat)

    # Rows are already in flattened-NCHW order, so this reshape is metadata-only:
    # the old post-kernel transpose (a full extra HBM round trip) is gone.
    return out_rows.reshape(B, C_out, Ho, Wo)


def _reference_forward(x_nchw, weight_oihw, stride):
    """Pure-JAX reference (strided 1x1 conv) for correctness checking."""
    return jax.lax.conv_general_dilated(
        x_nchw, weight_oihw,
        window_strides=(stride, stride), padding="VALID",
        dimension_numbers=("NCHW", "OIHW", "NCHW"),
        precision=jax.lax.Precision.HIGHEST,
    )


if __name__ == "__main__":
    key = jax.random.PRNGKey(0)
    k_x, k_w = jax.random.split(key)

    # DownsampleC(nIn=64, nOut=128, stride=2) -- satisfies `stride != 1 or nIn != nOut`.
    B, C_in, C_out, H, W, stride = 4, 64, 128, 16, 16, 2
    x = jax.random.normal(k_x, (B, C_in, H, W), dtype=jnp.float32)
    weight = jax.random.normal(k_w, (C_out, C_in, 1, 1), dtype=jnp.float32) * (
        1.0 / C_in
    ) ** 0.5

    ref = _reference_forward(x, weight, stride)

    # Exact f32 path (matches the PyTorch module's numerics).
    out = jax.block_until_ready(downsample_c_forward(x, weight, stride=stride))
    assert out.shape == (B, C_out, H // stride, W // stride), out.shape
    assert jnp.allclose(out, ref, atol=1e-4, rtol=1e-4), "f32 mismatch vs reference"

    # bf16 fast path (review: ~2x MXU rate + half the DMA bytes on v5e/v6e/v7x);
    # tolerance loosened for the bf16 input casts, per the review's correctness note.
    out_bf16 = jax.block_until_ready(
        downsample_c_forward(
            x.astype(jnp.bfloat16), weight.astype(jnp.bfloat16), stride=stride
        )
    )
    assert jnp.allclose(
        out_bf16.astype(jnp.float32), ref, atol=5e-2, rtol=5e-2
    ), "bf16 mismatch vs reference"

    print("KERNEL_OK")
</pallas_src>

<mosaic_0001>
module attributes {stable_mosaic.version = 11 : i64} {
  func.func @kernel(%arg0: i32, %arg1: memref<128x256xf32, #tpu.memory_space<vmem>>, %arg2: memref<128x64xf32, #tpu.memory_space<vmem>>, %arg3: memref<256x64xf32, #tpu.memory_space<vmem>>, %arg4: memref<256x64xf32, #tpu.memory_space<vmem>>) attributes {dimension_semantics = [#tpu.dimension_semantics<parallel>], iteration_bounds = array<i64: 2>, scalar_prefetch = 0 : i64, scratch_operands = 0 : i64, tpu.core_type = #tpu.core_type<tc>, window_params = [{transform_indices = @transform_0, window_bounds = array<i64: 128, 256>}, {pipeline_mode = #tpu.pipeline_mode<synchronous>, transform_indices = @transform_1, window_bounds = array<i64: 128, 64>}, {pipeline_mode = #tpu.pipeline_mode<synchronous>, transform_indices = @transform_2, window_bounds = array<i64: 256, 64>}, {transform_indices = @transform_3, window_bounds = array<i64: 256, 64>}]} {
    %c0 = arith.constant 0 : index
    %c0_0 = arith.constant 0 : index
    %0 = vector.load %arg1[%c0, %c0_0] : memref<128x256xf32, #tpu.memory_space<vmem>>, vector<128x256xf32>
    %c0_1 = arith.constant 0 : index
    %c0_2 = arith.constant 0 : index
    %1 = vector.load %arg3[%c0_1, %c0_2] : memref<256x64xf32, #tpu.memory_space<vmem>>, vector<256x64xf32>
    %cst = arith.constant dense<0.000000e+00> : vector<128x64xf32>
    %2 = tpu.matmul %0, %1, %cst {dimension_numbers = #tpu.dot_dimension_numbers<[1], [0], [0], [1], [0, 0, 1, 1], [], []>} : vector<128x256xf32>, vector<256x64xf32>, vector<128x64xf32> -> vector<128x64xf32>
    %c0_3 = arith.constant 0 : index
    %c0_4 = arith.constant 0 : index
    %3 = vector.load %arg2[%c0_3, %c0_4] : memref<128x64xf32, #tpu.memory_space<vmem>>, vector<128x64xf32>
    %4 = vector.extract_strided_slice %2 {offsets = [0, 0], sizes = [64, 64], strides = [1, 1]} : vector<128x64xf32> to vector<64x64xf32>
    %cst_5 = arith.constant dense<0.000000e+00> : vector<128x64xf32>
    %5 = tpu.matmul %3, %4, %cst_5 {dimension_numbers = #tpu.dot_dimension_numbers<[1], [0], [0], [1], [0, 0, 1, 1], [], []>} : vector<128x64xf32>, vector<64x64xf32>, vector<128x64xf32> -> vector<128x64xf32>
    %c0_6 = arith.constant 0 : index
    %c0_7 = arith.constant 0 : index
    %6 = vector.load %arg4[%c0_6, %c0_7] : memref<256x64xf32, #tpu.memory_space<vmem>>, vector<128x64xf32>
    tpu.vector_store %arg4[%c0_6, %c0_7], %5 {strides = array<i32>} : memref<256x64xf32, #tpu.memory_space<vmem>>, vector<128x64xf32>,
    %c0_8 = arith.constant 0 : index
    %c0_9 = arith.constant 0 : index
    %7 = vector.load %arg2[%c0_8, %c0_9] : memref<128x64xf32, #tpu.memory_space<vmem>>, vector<128x64xf32>
    %8 = vector.extract_strided_slice %2 {offsets = [64, 0], sizes = [64, 64], strides = [1, 1]} : vector<128x64xf32> to vector<64x64xf32>
    %cst_10 = arith.constant dense<0.000000e+00> : vector<128x64xf32>
    %9 = tpu.matmul %7, %8, %cst_10 {dimension_numbers = #tpu.dot_dimension_numbers<[1], [0], [0], [1], [0, 0, 1, 1], [], []>} : vector<128x64xf32>, vector<64x64xf32>, vector<128x64xf32> -> vector<128x64xf32>
    %c128 = arith.constant 128 : index
    %c0_11 = arith.constant 0 : index
    %10 = vector.load %arg4[%c128, %c0_11] : memref<256x64xf32, #tpu.memory_space<vmem>>, vector<128x64xf32>
    tpu.vector_store %arg4[%c128, %c0_11], %9 {strides = array<i32>} : memref<256x64xf32, #tpu.memory_space<vmem>>, vector<128x64xf32>,
    return
  }
  func.func @transform_0(%arg0: i32) -> (i32, i32) {
    %c0_i32 = arith.constant 0 : i32
    %c0_i32_0 = arith.constant 0 : i32
    return %arg0, %c0_i32 : i32, i32
  }
  func.func @transform_1(%arg0: i32) -> (i32, i32) {
    %c0_i32 = arith.constant 0 : i32
    %c0_i32_0 = arith.constant 0 : i32
    %c0_i32_1 = arith.constant 0 : i32
    return %c0_i32, %c0_i32_0 : i32, i32
  }
  func.func @transform_2(%arg0: i32) -> (i32, i32) {
    %c0_i32 = arith.constant 0 : i32
    %c0_i32_0 = arith.constant 0 : i32
    %c0_i32_1 = arith.constant 0 : i32
    return %c0_i32, %c0_i32_0 : i32, i32
  }
  func.func @transform_3(%arg0: i32) -> (i32, i32) {
    %c0_i32 = arith.constant 0 : i32
    %c0_i32_0 = arith.constant 0 : i32
    return %arg0, %c0_i32 : i32, i32
  }
}

</mosaic_0001>

<llo_original>
// kernel: downsample_c_forward.1
$region0: #{downsample_c_forward.1}
  #allocation0 [shape = 'u32[]', space=smem, size = 0x4, offset = 0x4, fixed_abs, tag = 'smem constant byte address 0x4 - core index']
  #allocation1 [shape = 'u32[144,128]{1,0:T(1,128)}', space=vmem, size = 0x12000, scoped, tag = 'internal scratch']
  %s0 = inlined_call_operand.vmem [shape: f32[256,256], index: 0, kind: input, shape index: {}]
  %s1 = inlined_call_operand.vmem [shape: f32[128,64], index: 1, kind: input, shape index: {}]
  %s2 = inlined_call_operand.vmem [shape: f32[256,64], index: 2, kind: input, shape index: {}]
  %s3 = inlined_call_operand.vmem [shape: f32[512,64], index: 3, kind: output, shape index: {}]
  %s4 = sld [smem:[#allocation0]]
  $region45: #{downsample_c_forward.1} parent=0
    _
  %s6 = ssub.s32 1, %s4
  %s7 = scalar_select 0, %s6, %s4
  loop: start=0, step=1, limit=4
  $region2: #{downsample_c_forward.1} parent=0 // loop_pre_header
    _
  $region3: #{downsample_c_forward.1} parent=0 // loop_header
    %s9 = sphi 0, %s13
    %p10 = scmp.ge.s32.totalorder %s9, 4
    %s19 = sphi 0, %s21
    %s22 = sphi 0, %s19
    %s23 = sphi 0, %s22
    %s39 = sphi 0, %s23
    %s43 = sphi 0, %s43
    %s45 = sphi 0, %s43
    %s46 = sphi 0, %s45
    %s60 = sphi 0, %s46
    %s64 = sphi 0, %s64
    %s66 = sphi 0, %s64
    %s67 = sphi 0, %s66
    %s81 = sphi 0, %s67
    %s87 = sphi 0, %s89
    %s90 = sphi 0, %s87
    %s91 = sphi 0, %s90
    %s107 = sphi 0, %s91
  $region4: #{downsample_c_forward.1} parent=0 // loop_header_branch
    %12 = sbr.rel (%p10) target = $region8
  $region5: #{downsample_c_forward.1} parent=0 // loop_body
    %s14 = ssub.s32 %s9, 1
    %s15 = ssub.s32 %s9, 2
    %s16 = sadd.s32 %s9, 1
    %s17 = ssub.s32 %s9, %s16
    %p18 = scmp.eq.s32.totalorder %s17, 0
    %s20 = sadd.s32 %s19, 1
    %s21 = scalar_select %p18, %s19, %s20
    %p24 = pneg %p18
    %p25 = scmp.eq.s32.totalorder %s9, 1
    %p26 = por %p24, %p25
    %p27 = scmp.ne.s32.totalorder %s19, %s22
    %p28 = scmp.eq.s32.totalorder %s9, 0
    %p29 = por %p27, %p28
    %p30 = scmp.ne.s32.totalorder %s19, %s22
    %p31 = scmp.eq.s32.totalorder %s14, 1
    %p32 = por %p30, %p31
    %p33 = scmp.ne.s32.totalorder %s22, %s23
    %p34 = scmp.eq.s32.totalorder %s14, 0
    %p35 = por %p33, %p34
    %p36 = scmp.ne.s32.totalorder %s22, %s23
    %p37 = scmp.eq.s32.totalorder %s15, 1
    %p38 = por %p36, %p37
    %p40 = scmp.ne.s32.totalorder %s23, %s39
    %p41 = scmp.eq.s32.totalorder %s15, 0
    %p42 = por %p40, %p41
    %s44 = sadd.s32 %s43, 1
    %p47 = scmp.eq.s32.totalorder %s9, 1
    %p48 = scmp.ne.s32.totalorder %s43, %s45
    %p49 = scmp.eq.s32.totalorder %s9, 0
    %p50 = por %p48, %p49
    %p51 = scmp.ne.s32.totalorder %s43, %s45
    %p52 = scmp.eq.s32.totalorder %s14, 1
    %p53 = por %p51, %p52
    %p54 = scmp.ne.s32.totalorder %s45, %s46
    %p55 = scmp.eq.s32.totalorder %s14, 0
    %p56 = por %p54, %p55
    %p57 = scmp.ne.s32.totalorder %s45, %s46
    %p58 = scmp.eq.s32.totalorder %s15, 1
    %p59 = por %p57, %p58
    %p61 = scmp.ne.s32.totalorder %s46, %s60
    %p62 = scmp.eq.s32.totalorder %s15, 0
    %p63 = por %p61, %p62
    %s65 = sadd.s32 %s64, 1
    %p68 = scmp.eq.s32.totalorder %s9, 1
    %p69 = scmp.ne.s32.totalorder %s64, %s66
    %p70 = scmp.eq.s32.totalorder %s9, 0
    %p71 = por %p69, %p70
    %p72 = scmp.ne.s32.totalorder %s64, %s66
    %p73 = scmp.eq.s32.totalorder %s14, 1
    %p74 = por %p72, %p73
    %p75 = scmp.ne.s32.totalorder %s66, %s67
    %p76 = scmp.eq.s32.totalorder %s14, 0
    %p77 = por %p75, %p76
    %p78 = scmp.ne.s32.totalorder %s66, %s67
    %p79 = scmp.eq.s32.totalorder %s15, 1
    %p80 = por %p78, %p79
    %p82 = scmp.ne.s32.totalorder %s67, %s81
    %p83 = scmp.eq.s32.totalorder %s15, 0
    %p84 = por %p82, %p83
    %s85 = ssub.s32 %s9, %s16
    %p86 = scmp.eq.s32.totalorder %s85, 0
    %s88 = sadd.s32 %s87, 1
    %s89 = scalar_select %p86, %s87, %s88
    %p92 = pneg %p86
    %p93 = scmp.eq.s32.totalorder %s9, 1
    %p94 = por %p92, %p93
    %p95 = scmp.ne.s32.totalorder %s87, %s90
    %p96 = scmp.eq.s32.totalorder %s9, 0
    %p97 = por %p95, %p96
    %p98 = scmp.ne.s32.totalorder %s87, %s90
    %p99 = scmp.eq.s32.totalorder %s14, 1
    %p100 = por %p98, %p99
    %p101 = scmp.ne.s32.totalorder %s90, %s91
    %p102 = scmp.eq.s32.totalorder %s14, 0
    %p103 = por %p101, %p102
    %p104 = scmp.ne.s32.totalorder %s90, %s91
    %p105 = scmp.eq.s32.totalorder %s15, 1
    %p106 = por %p104, %p105
    %p108 = scmp.ne.s32.totalorder %s91, %s107
    %p109 = scmp.eq.s32.totalorder %s15, 0
    %p110 = por %p108, %p109
    %p111 = scmp.le.s32.totalorder 1, %s9
    %p112 = scmp.lt.s32.totalorder %s9, 3
    %p113 = pnand %p111, %p112
    %p114 = pneg %p113
    // Predicated region
    $region9: #{downsample_c_forward.1} parent=5 // pred_check
      _
    $region10: #{downsample_c_forward.1} parent=5 // pred_check_branch
      %116 = sbr.rel (%p113) target = $region12
    $region11: #{downsample_c_forward.1} parent=5 // pred_region
      %s117 = ssub.s32 %s9, 1
      // Predicated region
      $region13: #{downsample_c_forward.1} parent=11 // pred_check
        %p118 = pneg %p56
      $region14: #{downsample_c_forward.1} parent=11 // pred_check_branch
        %120 = sbr.rel (%p118) target = $region16
      $region15: #{downsample_c_forward.1} parent=11 // pred_region
        _
      $region16: #{downsample_c_forward.1} parent=11 // pred_fallthru
        _
      // Predicated region
      $region17: #{downsample_c_forward.1} parent=11 // pred_check
        %p121 = pneg %p77
      $region18: #{downsample_c_forward.1} parent=11 // pred_check_branch
        %123 = sbr.rel (%p121) target = $region20
      $region19: #{downsample_c_forward.1} parent=11 // pred_region
        _
      $region20: #{downsample_c_forward.1} parent=11 // pred_fallthru
        _
    $region12: #{downsample_c_forward.1} parent=5 // pred_fallthru
      _
    %p124 = scmp.lt.s32.totalorder %s9, 2
    // Predicated region
    $region21: #{downsample_c_forward.1} parent=5 // pred_check
      %p125 = pneg %p124
    $region22: #{downsample_c_forward.1} parent=5 // pred_check_branch
      %127 = sbr.rel (%p125) target = $region24
    $region23: #{downsample_c_forward.1} parent=5 // pred_region
      // Predicated region
      $region25: #{downsample_c_forward.1} parent=23 // pred_check
        %p128 = pneg %p29
      $region26: #{downsample_c_forward.1} parent=23 // pred_check_branch
        %130 = sbr.rel (%p128) target = $region28
      $region27: #{downsample_c_forward.1} parent=23 // pred_region
        %s131 = smul.u32 16, %s9
        %p132 = scmp.lt.s32.totalorder %s131, 31
        %s133 = scalar_select %p132, %s131, 31
        %s134 = smul.addr %s133, 2
        %s135 = smul.addr %s134, 8
        %s136 = scalar_lea.vmem %s0, %s135
        %s137 = smul.u32 16, %s9
      $region28: #{downsample_c_forward.1} parent=23 // pred_fallthru
        _
    $region24: #{downsample_c_forward.1} parent=5 // pred_fallthru
      _
    %p138 = scmp.le.s32.totalorder 1, %s9
    %p139 = scmp.lt.s32.totalorder %s9, 3
    %p140 = pnand %p138, %p139
    %p141 = pneg %p140
    // Predicated region
    $region29: #{downsample_c_forward.1} parent=5 // pred_check
      _
    $region30: #{downsample_c_forward.1} parent=5 // pred_check_branch
      %143 = sbr.rel (%p140) target = $region32
    $region31: #{downsample_c_forward.1} parent=5 // pred_region
      %s144 = ssub.s32 %s9, 1
      %s145 = smul.u32 16, %s14
      %p146 = scmp.lt.s32.totalorder %s145, 31
      %s147 = scalar_select %p146, %s145, 31
      %s148 = smul.addr %s147, 2
      %s149 = smul.addr %s148, 8
      %s150 = scalar_lea.vmem %s0, %s149
      %p151 = pneg %p35
      %p152 = pneg %p32
      %p153 = pneg %p56
      %p154 = pneg %p53
      %p155 = pneg %p77
      %p156 = pneg %p74
      %p157 = pneg %p103
      %p158 = pneg %p100
      %s159 = smul.u32 32, %s14
      %p160 = scmp.lt.s32.totalorder %s159, 63
      %s161 = scalar_select %p160, %s159, 63
      %s162 = smul.addr %s161, 8
      %s163 = scalar_lea.vmem %s3, %s162
      %s164 = smul.u32 16, %s14
      %p165 = scmp.lt.s32.totalorder %s164, 31
      %s166 = scalar_select %p165, %s164, 31
      %s167 = smul.addr %s166, 2
      %s168 = smul.addr %s167, 8
      %s169 = scalar_lea.vmem %s0, %s168
      %s170 = smul.u32 16, %s14
      %s171 = smul.u32 32, %s14
      %p172 = scmp.lt.s32.totalorder %s171, 63
      %s173 = scalar_select %p172, %s171, 63
      %s174 = smul.addr %s173, 8
      %s175 = scalar_lea.vmem %s3, %s174
      %s176 = smul.u32 32, %s14
      %v177 = vld [vmem:[%s169] sm:$0xff]
      %v178 = vld [vmem:[%s169 + $0x8] sm:$0xff]
      %v179 = vld [vmem:[%s169 + $0x10] sm:$0xff]
      %v180 = vld [vmem:[%s169 + $0x18] sm:$0xff]
      %v181 = vld [vmem:[%s169 + $0x20] sm:$0xff]
      %v182 = vld [vmem:[%s169 + $0x28] sm:$0xff]
      %v183 = vld [vmem:[%s169 + $0x30] sm:$0xff]
      %v184 = vld [vmem:[%s169 + $0x38] sm:$0xff]
      %v185 = vld [vmem:[%s169 + $0x40] sm:$0xff]
      %v186 = vld [vmem:[%s169 + $0x48] sm:$0xff]
      %v187 = vld [vmem:[%s169 + $0x50] sm:$0xff]
      %v188 = vld [vmem:[%s169 + $0x58] sm:$0xff]
      %v189 = vld [vmem:[%s169 + $0x60] sm:$0xff]
      %v190 = vld [vmem:[%s169 + $0x68] sm:$0xff]
      %v191 = vld [vmem:[%s169 + $0x70] sm:$0xff]
      %v192 = vld [vmem:[%s169 + $0x78] sm:$0xff]
      %v193 = vld [vmem:[%s169 + $0x80] sm:$0xff]
      %v194 = vld [vmem:[%s169 + $0x88] sm:$0xff]
      %v195 = vld [vmem:[%s169 + $0x90] sm:$0xff]
      %v196 = vld [vmem:[%s169 + $0x98] sm:$0xff]
      %v197 = vld [vmem:[%s169 + $0xa0] sm:$0xff]
      %v198 = vld [vmem:[%s169 + $0xa8] sm:$0xff]
      %v199 = vld [vmem:[%s169 + $0xb0] sm:$0xff]
      %v200 = vld [vmem:[%s169 + $0xb8] sm:$0xff]
      %v201 = vld [vmem:[%s169 + $0xc0] sm:$0xff]
      %v202 = vld [vmem:[%s169 + $0xc8] sm:$0xff]
      %v203 = vld [vmem:[%s169 + $0xd0] sm:$0xff]
      %v204 = vld [vmem:[%s169 + $0xd8] sm:$0xff]
      %v205 = vld [vmem:[%s169 + $0xe0] sm:$0xff]
      %v206 = vld [vmem:[%s169 + $0xe8] sm:$0xff]
      %v207 = vld [vmem:[%s169 + $0xf0] sm:$0xff]
      %v208 = vld [vmem:[%s169 + $0xf8] sm:$0xff]
      %v209 = vld [vmem:[%s2] sm:$0xff]
      %v210 = vld [vmem:[%s2 + $0x8] sm:$0xff]
      %v211 = vld [vmem:[%s2 + $0x10] sm:$0xff]
      %v212 = vld [vmem:[%s2 + $0x18] sm:$0xff]
      %v213 = vld [vmem:[%s2 + $0x20] sm:$0xff]
      %v214 = vld [vmem:[%s2 + $0x28] sm:$0xff]
      %v215 = vld [vmem:[%s2 + $0x30] sm:$0xff]
      %v216 = vld [vmem:[%s2 + $0x38] sm:$0xff]
      %v217 = vld [vmem:[%s2 + $0x40] sm:$0xff]
      %v218 = vld [vmem:[%s2 + $0x48] sm:$0xff]
      %v219 = vld [vmem:[%s2 + $0x50] sm:$0xff]
      %v220 = vld [vmem:[%s2 + $0x58] sm:$0xff]
      %v221 = vld [vmem:[%s2 + $0x60] sm:$0xff]
      %v222 = vld [vmem:[%s2 + $0x68] sm:$0xff]
      %v223 = vld [vmem:[%s2 + $0x70] sm:$0xff]
      %v224 = vld [vmem:[%s2 + $0x78] sm:$0xff]
      %v225 = vld [vmem:[%s2 + $0x80] sm:$0xff]
      %v226 = vld [vmem:[%s2 + $0x88] sm:$0xff]
      %v227 = vld [vmem:[%s2 + $0x90] sm:$0xff]
      %v228 = vld [vmem:[%s2 + $0x98] sm:$0xff]
      %v229 = vld [vmem:[%s2 + $0xa0] sm:$0xff]
      %v230 = vld [vmem:[%s2 + $0xa8] sm:$0xff]
      %v231 = vld [vmem:[%s2 + $0xb0] sm:$0xff]
      %v232 = vld [vmem:[%s2 + $0xb8] sm:$0xff]
      %v233 = vld [vmem:[%s2 + $0xc0] sm:$0xff]
      %v234 = vld [vmem:[%s2 + $0xc8] sm:$0xff]
      %v235 = vld [vmem:[%s2 + $0xd0] sm:$0xff]
      %v236 = vld [vmem:[%s2 + $0xd8] sm:$0xff]
      %v237 = vld [vmem:[%s2 + $0xe0] sm:$0xff]
      %v238 = vld [vmem:[%s2 + $0xe8] sm:$0xff]
      %v239 = vld [vmem:[%s2 + $0xf0] sm:$0xff]
      %v240 = vld [vmem:[%s2 + $0xf8] sm:$0xff]
      %241 = vmatprep.subr.mxu0 0.0
      %242 = vmatpush1.msra.mxu0 %v224
      %243 = vmatprep.subr.mxu0 0.0
      %244 = vmatpush1.msra.mxu0 %v223
      %245 = vmatprep.subr.mxu0 0.0
      %246 = vmatpush1.msra.mxu0 %v222
      %247 = vmatprep.subr.mxu0 0.0
      %248 = vmatpush1.msra.mxu0 %v221
      %249 = vmatprep.subr.mxu0 0.0
      %250 = vmatpush1.msra.mxu0 %v220
      %251 = vmatprep.subr.mxu0 0.0
      %252 = vmatpush1.msra.mxu0 %v219
      %253 = vmatprep.subr.mxu0 0.0
      %254 = vmatpush1.msra.mxu0 %v218
      %255 = vmatprep.subr.mxu0 0.0
      %256 = vmatpush1.msra.mxu0 %v217
      %257 = vmatprep.subr.mxu0 0.0
      %258 = vmatpush1.msra.mxu0 %v216
      %259 = vmatprep.subr.mxu0 0.0
      %260 = vmatpush1.msra.mxu0 %v215
      %261 = vmatprep.subr.mxu0 0.0
      %262 = vmatpush1.msra.mxu0 %v214
      %263 = vmatprep.subr.mxu0 0.0
      %264 = vmatpush1.msra.mxu0 %v213
      %265 = vmatprep.subr.mxu0 0.0
      %266 = vmatpush1.msra.mxu0 %v212
      %267 = vmatprep.subr.mxu0 0.0
      %268 = vmatpush1.msra.mxu0 %v211
      %269 = vmatprep.subr.mxu0 0.0
      %270 = vmatpush1.msra.mxu0 %v210
      %271 = vmatprep.subr.mxu0 0.0
      %272 = vmatpush1.msra.mxu0 %v209
      %273 = vmatprep.subr.mxu0 0.0
      %274 = vmatpush2.msra.mxu0 %v240
      %275 = vmatprep.subr.mxu0 0.0
      %276 = vmatpush2.msra.mxu0 %v239
      %277 = vmatprep.subr.mxu0 0.0
      %278 = vmatpush2.msra.mxu0 %v238
      %279 = vmatprep.subr.mxu0 0.0
      %280 = vmatpush2.msra.mxu0 %v237
      %281 = vmatprep.subr.mxu0 0.0
      %282 = vmatpush2.msra.mxu0 %v236
      %283 = vmatprep.subr.mxu0 0.0
      %284 = vmatpush2.msra.mxu0 %v235
      %285 = vmatprep.subr.mxu0 0.0
      %286 = vmatpush2.msra.mxu0 %v234
      %287 = vmatprep.subr.mxu0 0.0
      %288 = vmatpush2.msra.mxu0 %v233
      %289 = vmatprep.subr.mxu0 0.0
      %290 = vmatpush2.msra.mxu0 %v232
      %291 = vmatprep.subr.mxu0 0.0
      %292 = vmatpush2.msra.mxu0 %v231
      %293 = vmatprep.subr.mxu0 0.0
      %294 = vmatpush2.msra.mxu0 %v230
      %295 = vmatprep.subr.mxu0 0.0
      %296 = vmatpush2.msra.mxu0 %v229
      %297 = vmatprep.subr.mxu0 0.0
      %298 = vmatpush2.msra.mxu0 %v228
      %299 = vmatprep.subr.mxu0 0.0
      %300 = vmatpush2.msra.mxu0 %v227
      %301 = vmatprep.subr.mxu0 0.0
      %302 = vmatpush2.msra.mxu0 %v226
      %303 = vmatprep.subr.mxu0 0.0
      %304 = vmatpush2.msra.mxu0 %v225
      %305 = vmatprep.mubr.f32.mxu0 %v178
      %306 = vmatmul.mubr.f32.gmra.mxu0 %v177
      %v307 = vpop.f32.mrf.mxu0
      %v308 = vadd.f32 0.0, %v307
      %v309 = vpop.f32.mrf.mxu0
      %310 = vmatprep.mubr.f32.mxu0 %v180
      %311 = vmatmul.mubr.f32.gmra.mxu0 %v179
      %v312 = vpop.f32.mrf.mxu0
      %v313 = vadd.f32 0.0, %v312
      %v314 = vpop.f32.mrf.mxu0
      %315 = vmatprep.mubr.f32.mxu0 %v182
      %316 = vmatmul.mubr.f32.gmra.mxu0 %v181
      %v317 = vpop.f32.mrf.mxu0
      %v318 = vadd.f32 0.0, %v317
      %v319 = vpop.f32.mrf.mxu0
      %320 = vmatprep.mubr.f32.mxu0 %v184
      %321 = vmatmul.mubr.f32.gmra.mxu0 %v183
      %v322 = vpop.f32.mrf.mxu0
      %v323 = vadd.f32 0.0, %v322
      %v324 = vpop.f32.mrf.mxu0
      %325 = vmatprep.mubr.f32.mxu0 %v186
      %326 = vmatmul.mubr.f32.gmra.mxu0 %v185
      %v327 = vpop.f32.mrf.mxu0
      %v328 = vadd.f32 0.0, %v327
      %v329 = vpop.f32.mrf.mxu0
      %330 = vmatprep.mubr.f32.mxu0 %v188
      %331 = vmatmul.mubr.f32.gmra.mxu0 %v187
      %v332 = vpop.f32.mrf.mxu0
      %v333 = vadd.f32 0.0, %v332
      %v334 = vpop.f32.mrf.mxu0
      %335 = vmatprep.mubr.f32.mxu0 %v190
      %336 = vmatmul.mubr.f32.gmra.mxu0 %v189
      %v337 = vpop.f32.mrf.mxu0
      %v338 = vadd.f32 0.0, %v337
      %v339 = vpop.f32.mrf.mxu0
      %340 = vmatprep.mubr.f32.mxu0 %v192
      %341 = vmatmul.mubr.f32.gmra.mxu0 %v191
      %v342 = vpop.f32.mrf.mxu0
      %v343 = vadd.f32 0.0, %v342
      %v344 = vpop.f32.mrf.mxu0
      %345 = vmatprep.mubr.f32.mxu0 %v194
      %346 = vmatmul.mubr.f32.gmra.mxu0 %v193
      %v347 = vpop.f32.mrf.mxu0
      %v348 = vadd.f32 0.0, %v347
      %v349 = vpop.f32.mrf.mxu0
      %350 = vmatprep.mubr.f32.mxu0 %v196
      %351 = vmatmul.mubr.f32.gmra.mxu0 %v195
      %v352 = vpop.f32.mrf.mxu0
      %v353 = vadd.f32 0.0, %v352
      %v354 = vpop.f32.mrf.mxu0
      %355 = vmatprep.mubr.f32.mxu0 %v198
      %356 = vmatmul.mubr.f32.gmra.mxu0 %v197
      %v357 = vpop.f32.mrf.mxu0
      %v358 = vadd.f32 0.0, %v357
      %v359 = vpop.f32.mrf.mxu0
      %360 = vmatprep.mubr.f32.mxu0 %v200
      %361 = vmatmul.mubr.f32.gmra.mxu0 %v199
      %v362 = vpop.f32.mrf.mxu0
      %v363 = vadd.f32 0.0, %v362
      %v364 = vpop.f32.mrf.mxu0
      %365 = vmatprep.mubr.f32.mxu0 %v202
      %366 = vmatmul.mubr.f32.gmra.mxu0 %v201
      %v367 = vpop.f32.mrf.mxu0
      %v368 = vadd.f32 0.0, %v367
      %v369 = vpop.f32.mrf.mxu0
      %370 = vmatprep.mubr.f32.mxu0 %v204
      %371 = vmatmul.mubr.f32.gmra.mxu0 %v203
      %v372 = vpop.f32.mrf.mxu0
      %v373 = vadd.f32 0.0, %v372
      %v374 = vpop.f32.mrf.mxu0
      %375 = vmatprep.mubr.f32.mxu0 %v206
      %376 = vmatmul.mubr.f32.gmra.mxu0 %v205
      %v377 = vpop.f32.mrf.mxu0
      %v378 = vadd.f32 0.0, %v377
      %v379 = vpop.f32.mrf.mxu0
      %380 = vmatprep.mubr.f32.mxu0 %v208
      %381 = vmatmul.mubr.f32.gmra.mxu0 %v207
      %v382 = vpop.f32.mrf.mxu0
      %v383 = vadd.f32 0.0, %v382
      %v384 = vpop.f32.mrf.mxu0
      %385 = vdwg.mxu0
      %v386 = vld [vmem:[%s1] sm:$0xff]
      %v387 = vld [vmem:[%s1 + $0x8] sm:$0xff]
      %v388 = vld [vmem:[%s1 + $0x10] sm:$0xff]
      %v389 = vld [vmem:[%s1 + $0x18] sm:$0xff]
      %v390 = vld [vmem:[%s1 + $0x20] sm:$0xff]
      %v391 = vld [vmem:[%s1 + $0x28] sm:$0xff]
      %v392 = vld [vmem:[%s1 + $0x30] sm:$0xff]
      %v393 = vld [vmem:[%s1 + $0x38] sm:$0xff]
      %v394 = vld [vmem:[%s1 + $0x40] sm:$0xff]
      %v395 = vld [vmem:[%s1 + $0x48] sm:$0xff]
      %v396 = vld [vmem:[%s1 + $0x50] sm:$0xff]
      %v397 = vld [vmem:[%s1 + $0x58] sm:$0xff]
      %v398 = vld [vmem:[%s1 + $0x60] sm:$0xff]
      %v399 = vld [vmem:[%s1 + $0x68] sm:$0xff]
      %v400 = vld [vmem:[%s1 + $0x70] sm:$0xff]
      %v401 = vld [vmem:[%s1 + $0x78] sm:$0xff]
      %vm402 = vcmask 523264
      %v404 = vsel %vm402, %v386, 0
      %v407 = vsel %vm402, %v387, 0
      %v410 = vsel %vm402, %v388, 0
      %v413 = vsel %vm402, %v389, 0
      %v416 = vsel %vm402, %v390, 0
      %v419 = vsel %vm402, %v391, 0
      %v422 = vsel %vm402, %v392, 0
      %v425 = vsel %vm402, %v393, 0
      %v428 = vsel %vm402, %v394, 0
      %v431 = vsel %vm402, %v395, 0
      %v434 = vsel %vm402, %v396, 0
      %v437 = vsel %vm402, %v397, 0
      %v440 = vsel %vm402, %v398, 0
      %v443 = vsel %vm402, %v399, 0
      %v446 = vsel %vm402, %v400, 0
      %v449 = vsel %vm402, %v401, 0
      %451 = vmatprep.subr.mxu0 0.0
      %452 = vmatpush1.msra.mxu0 0.0
      %453 = vmatprep.subr.mxu0 0.0
      %454 = vmatpush1.msra.mxu0 0.0
      %455 = vmatprep.subr.mxu0 0.0
      %456 = vmatpush1.msra.mxu0 0.0
      %457 = vmatprep.subr.mxu0 0.0
      %458 = vmatpush1.msra.mxu0 0.0
      %459 = vmatprep.subr.mxu0 0.0
      %460 = vmatpush1.msra.mxu0 0.0
      %461 = vmatprep.subr.mxu0 0.0
      %462 = vmatpush1.msra.mxu0 0.0
      %463 = vmatprep.subr.mxu0 0.0
      %464 = vmatpush1.msra.mxu0 0.0
      %465 = vmatprep.subr.mxu0 0.0
      %466 = vmatpush1.msra.mxu0 0.0
      %467 = vmatprep.subr.mxu0 0.0
      %468 = vmatpush1.msra.mxu0 %v343
      %469 = vmatprep.subr.mxu0 0.0
      %470 = vmatpush1.msra.mxu0 %v338
      %471 = vmatprep.subr.mxu0 0.0
      %472 = vmatpush1.msra.mxu0 %v333
      %473 = vmatprep.subr.mxu0 0.0
      %474 = vmatpush1.msra.mxu0 %v328
      %475 = vmatprep.subr.mxu0 0.0
      %476 = vmatpush1.msra.mxu0 %v323
      %477 = vmatprep.subr.mxu0 0.0
      %478 = vmatpush1.msra.mxu0 %v318
      %479 = vmatprep.subr.mxu0 0.0
      %480 = vmatpush1.msra.mxu0 %v313
      %481 = vmatprep.subr.mxu0 0.0
      %482 = vmatpush1.msra.mxu0 %v308
      %483 = vmatprep.subr.mxu0 0.0
      %484 = vmatpush2.msra.mxu0 0.0
      %485 = vmatprep.subr.mxu0 0.0
      %486 = vmatpush2.msra.mxu0 0.0
      %487 = vmatprep.subr.mxu0 0.0
      %488 = vmatpush2.msra.mxu0 0.0
      %489 = vmatprep.subr.mxu0 0.0
      %490 = vmatpush2.msra.mxu0 0.0
      %491 = vmatprep.subr.mxu0 0.0
      %492 = vmatpush2.msra.mxu0 0.0
      %493 = vmatprep.subr.mxu0 0.0
      %494 = vmatpush2.msra.mxu0 0.0
      %495 = vmatprep.subr.mxu0 0.0
      %496 = vmatpush2.msra.mxu0 0.0
      %497 = vmatprep.subr.mxu0 0.0
      %498 = vmatpush2.msra.mxu0 0.0
      %499 = vmatprep.subr.mxu0 0.0
      %500 = vmatpush2.msra.mxu0 0.0
      %501 = vmatprep.subr.mxu0 0.0
      %502 = vmatpush2.msra.mxu0 0.0
      %503 = vmatprep.subr.mxu0 0.0
      %504 = vmatpush2.msra.mxu0 0.0
      %505 = vmatprep.subr.mxu0 0.0
      %506 = vmatpush2.msra.mxu0 0.0
      %507 = vmatprep.subr.mxu0 0.0
      %508 = vmatpush2.msra.mxu0 0.0
      %509 = vmatprep.subr.mxu0 0.0
      %510 = vmatpush2.msra.mxu0 0.0
      %511 = vmatprep.subr.mxu0 0.0
      %512 = vmatpush2.msra.mxu0 0.0
      %513 = vmatprep.subr.mxu0 0.0
      %514 = vmatpush2.msra.mxu0 0.0
      %515 = vmatprep.mubr.f32.mxu0 0.0
      %516 = vmatmul.mubr.f32.gmra.mxu0 %v404
      %v517 = vpop.f32.mrf.mxu0
      %v518 = vadd.f32 0.0, %v517
      %v519 = vpop.f32.mrf.mxu0
      %520 = vmatprep.mubr.f32.mxu0 0.0
      %521 = vmatmul.mubr.f32.gmra.mxu0 %v407
      %v522 = vpop.f32.mrf.mxu0
      %v523 = vadd.f32 0.0, %v522
      %v524 = vpop.f32.mrf.mxu0
      %525 = vmatprep.mubr.f32.mxu0 0.0
      %526 = vmatmul.mubr.f32.gmra.mxu0 %v410
      %v527 = vpop.f32.mrf.mxu0
      %v528 = vadd.f32 0.0, %v527
      %v529 = vpop.f32.mrf.mxu0
      %530 = vmatprep.mubr.f32.mxu0 0.0
      %531 = vmatmul.mubr.f32.gmra.mxu0 %v413
      %v532 = vpop.f32.mrf.mxu0
      %v533 = vadd.f32 0.0, %v532
      %v534 = vpop.f32.mrf.mxu0
      %535 = vmatprep.mubr.f32.mxu0 0.0
      %536 = vmatmul.mubr.f32.gmra.mxu0 %v416
      %v537 = vpop.f32.mrf.mxu0
      %v538 = vadd.f32 0.0, %v537
      %v539 = vpop.f32.mrf.mxu0
      %540 = vmatprep.mubr.f32.mxu0 0.0
      %541 = vmatmul.mubr.f32.gmra.mxu0 %v419
      %v542 = vpop.f32.mrf.mxu0
      %v543 = vadd.f32 0.0, %v542
      %v544 = vpop.f32.mrf.mxu0
      %545 = vmatprep.mubr.f32.mxu0 0.0
      %546 = vmatmul.mubr.f32.gmra.mxu0 %v422
      %v547 = vpop.f32.mrf.mxu0
      %v548 = vadd.f32 0.0, %v547
      %v549 = vpop.f32.mrf.mxu0
      %550 = vmatprep.mubr.f32.mxu0 0.0
      %551 = vmatmul.mubr.f32.gmra.mxu0 %v425
      %v552 = vpop.f32.mrf.mxu0
      %v553 = vadd.f32 0.0, %v552
      %v554 = vpop.f32.mrf.mxu0
      %555 = vmatprep.mubr.f32.mxu0 0.0
      %556 = vmatmul.mubr.f32.gmra.mxu0 %v428
      %v557 = vpop.f32.mrf.mxu0
      %v558 = vadd.f32 0.0, %v557
      %v559 = vpop.f32.mrf.mxu0
      %560 = vmatprep.mubr.f32.mxu0 0.0
      %561 = vmatmul.mubr.f32.gmra.mxu0 %v431
      %v562 = vpop.f32.mrf.mxu0
      %v563 = vadd.f32 0.0, %v562
      %v564 = vpop.f32.mrf.mxu0
      %565 = vmatprep.mubr.f32.mxu0 0.0
      %566 = vmatmul.mubr.f32.gmra.mxu0 %v434
      %v567 = vpop.f32.mrf.mxu0
      %v568 = vadd.f32 0.0, %v567
      %v569 = vpop.f32.mrf.mxu0
      %570 = vmatprep.mubr.f32.mxu0 0.0
      %571 = vmatmul.mubr.f32.gmra.mxu0 %v437
      %v572 = vpop.f32.mrf.mxu0
      %v573 = vadd.f32 0.0, %v572
      %v574 = vpop.f32.mrf.mxu0
      %575 = vmatprep.mubr.f32.mxu0 0.0
      %576 = vmatmul.mubr.f32.gmra.mxu0 %v440
      %v577 = vpop.f32.mrf.mxu0
      %v578 = vadd.f32 0.0, %v577
      %v579 = vpop.f32.mrf.mxu0
      %580 = vmatprep.mubr.f32.mxu0 0.0
      %581 = vmatmul.mubr.f32.gmra.mxu0 %v443
      %v582 = vpop.f32.mrf.mxu0
      %v583 = vadd.f32 0.0, %v582
      %v584 = vpop.f32.mrf.mxu0
      %585 = vmatprep.mubr.f32.mxu0 0.0
      %586 = vmatmul.mubr.f32.gmra.mxu0 %v446
      %v587 = vpop.f32.mrf.mxu0
      %v588 = vadd.f32 0.0, %v587
      %v589 = vpop.f32.mrf.mxu0
      %590 = vmatprep.mubr.f32.mxu0 0.0
      %591 = vmatmul.mubr.f32.gmra.mxu0 %v449
      %v592 = vpop.f32.mrf.mxu0
      %v593 = vadd.f32 0.0, %v592
      %v594 = vpop.f32.mrf.mxu0
      %595 = vdwg.mxu0
      %596 = vst.msk [vmem:[%s175] sm:$0xff] %vm402, %v518
      %597 = vst.msk [vmem:[%s175 + $0x8] sm:$0xff] %vm402, %v523
      %598 = vst.msk [vmem:[%s175 + $0x10] sm:$0xff] %vm402, %v528
      %599 = vst.msk [vmem:[%s175 + $0x18] sm:$0xff] %vm402, %v533
      %600 = vst.msk [vmem:[%s175 + $0x20] sm:$0xff] %vm402, %v538
      %601 = vst.msk [vmem:[%s175 + $0x28] sm:$0xff] %vm402, %v543
      %602 = vst.msk [vmem:[%s175 + $0x30] sm:$0xff] %vm402, %v548
      %603 = vst.msk [vmem:[%s175 + $0x38] sm:$0xff] %vm402, %v553
      %604 = vst.msk [vmem:[%s175 + $0x40] sm:$0xff] %vm402, %v558
      %605 = vst.msk [vmem:[%s175 + $0x48] sm:$0xff] %vm402, %v563
      %606 = vst.msk [vmem:[%s175 + $0x50] sm:$0xff] %vm402, %v568
      %607 = vst.msk [vmem:[%s175 + $0x58] sm:$0xff] %vm402, %v573
      %608 = vst.msk [vmem:[%s175 + $0x60] sm:$0xff] %vm402, %v578
      %609 = vst.msk [vmem:[%s175 + $0x68] sm:$0xff] %vm402, %v583
      %610 = vst.msk [vmem:[%s175 + $0x70] sm:$0xff] %vm402, %v588
      %611 = vst.msk [vmem:[%s175 + $0x78] sm:$0xff] %vm402, %v593
      %v612 = vld [vmem:[%s1] sm:$0xff]
      %v613 = vld [vmem:[%s1 + $0x8] sm:$0xff]
      %v614 = vld [vmem:[%s1 + $0x10] sm:$0xff]
      %v615 = vld [vmem:[%s1 + $0x18] sm:$0xff]
      %v616 = vld [vmem:[%s1 + $0x20] sm:$0xff]
      %v617 = vld [vmem:[%s1 + $0x28] sm:$0xff]
      %v618 = vld [vmem:[%s1 + $0x30] sm:$0xff]
      %v619 = vld [vmem:[%s1 + $0x38] sm:$0xff]
      %v620 = vld [vmem:[%s1 + $0x40] sm:$0xff]
      %v621 = vld [vmem:[%s1 + $0x48] sm:$0xff]
      %v622 = vld [vmem:[%s1 + $0x50] sm:$0xff]
      %v623 = vld [vmem:[%s1 + $0x58] sm:$0xff]
      %v624 = vld [vmem:[%s1 + $0x60] sm:$0xff]
      %v625 = vld [vmem:[%s1 + $0x68] sm:$0xff]
      %v626 = vld [vmem:[%s1 + $0x70] sm:$0xff]
      %v627 = vld [vmem:[%s1 + $0x78] sm:$0xff]
      %v629 = vsel %vm402, %v612, 0
      %v632 = vsel %vm402, %v613, 0
      %v635 = vsel %vm402, %v614, 0
      %v638 = vsel %vm402, %v615, 0
      %v641 = vsel %vm402, %v616, 0
      %v644 = vsel %vm402, %v617, 0
      %v647 = vsel %vm402, %v618, 0
      %v650 = vsel %vm402, %v619, 0
      %v653 = vsel %vm402, %v620, 0
      %v656 = vsel %vm402, %v621, 0
      %v659 = vsel %vm402, %v622, 0
      %v662 = vsel %vm402, %v623, 0
      %v665 = vsel %vm402, %v624, 0
      %v668 = vsel %vm402, %v625, 0
      %v671 = vsel %vm402, %v626, 0
      %v674 = vsel %vm402, %v627, 0
      %676 = vmatprep.subr.mxu0 0.0
      %677 = vmatpush1.msra.mxu0 0.0
      %678 = vmatprep.subr.mxu0 0.0
      %679 = vmatpush1.msra.mxu0 0.0
      %680 = vmatprep.subr.mxu0 0.0
      %681 = vmatpush1.msra.mxu0 0.0
      %682 = vmatprep.subr.mxu0 0.0
      %683 = vmatpush1.msra.mxu0 0.0
      %684 = vmatprep.subr.mxu0 0.0
      %685 = vmatpush1.msra.mxu0 0.0
      %686 = vmatprep.subr.mxu0 0.0
      %687 = vmatpush1.msra.mxu0 0.0
      %688 = vmatprep.subr.mxu0 0.0
      %689 = vmatpush1.msra.mxu0 0.0
      %690 = vmatprep.subr.mxu0 0.0
      %691 = vmatpush1.msra.mxu0 0.0
      %692 = vmatprep.subr.mxu0 0.0
      %693 = vmatpush1.msra.mxu0 %v383
      %694 = vmatprep.subr.mxu0 0.0
      %695 = vmatpush1.msra.mxu0 %v378
      %696 = vmatprep.subr.mxu0 0.0
      %697 = vmatpush1.msra.mxu0 %v373
      %698 = vmatprep.subr.mxu0 0.0
      %699 = vmatpush1.msra.mxu0 %v368
      %700 = vmatprep.subr.mxu0 0.0
      %701 = vmatpush1.msra.mxu0 %v363
      %702 = vmatprep.subr.mxu0 0.0
      %703 = vmatpush1.msra.mxu0 %v358
      %704 = vmatprep.subr.mxu0 0.0
      %705 = vmatpush1.msra.mxu0 %v353
      %706 = vmatprep.subr.mxu0 0.0
      %707 = vmatpush1.msra.mxu0 %v348
      %708 = vmatprep.subr.mxu0 0.0
      %709 = vmatpush2.msra.mxu0 0.0
      %710 = vmatprep.subr.mxu0 0.0
      %711 = vmatpush2.msra.mxu0 0.0
      %712 = vmatprep.subr.mxu0 0.0
      %713 = vmatpush2.msra.mxu0 0.0
      %714 = vmatprep.subr.mxu0 0.0
      %715 = vmatpush2.msra.mxu0 0.0
      %716 = vmatprep.subr.mxu0 0.0
      %717 = vmatpush2.msra.mxu0 0.0
      %718 = vmatprep.subr.mxu0 0.0
      %719 = vmatpush2.msra.mxu0 0.0
      %720 = vmatprep.subr.mxu0 0.0
      %721 = vmatpush2.msra.mxu0 0.0
      %722 = vmatprep.subr.mxu0 0.0
      %723 = vmatpush2.msra.mxu0 0.0
      %724 = vmatprep.subr.mxu0 0.0
      %725 = vmatpush2.msra.mxu0 0.0
      %726 = vmatprep.subr.mxu0 0.0
      %727 = vmatpush2.msra.mxu0 0.0
      %728 = vmatprep.subr.mxu0 0.0
      %729 = vmatpush2.msra.mxu0 0.0
      %730 = vmatprep.subr.mxu0 0.0
      %731 = vmatpush2.msra.mxu0 0.0
      %732 = vmatprep.subr.mxu0 0.0
      %733 = vmatpush2.msra.mxu0 0.0
      %734 = vmatprep.subr.mxu0 0.0
      %735 = vmatpush2.msra.mxu0 0.0
      %736 = vmatprep.subr.mxu0 0.0
      %737 = vmatpush2.msra.mxu0 0.0
      %738 = vmatprep.subr.mxu0 0.0
      %739 = vmatpush2.msra.mxu0 0.0
      %740 = vmatprep.mubr.f32.mxu0 0.0
      %741 = vmatmul.mubr.f32.gmra.mxu0 %v629
      %v742 = vpop.f32.mrf.mxu0
      %v743 = vadd.f32 0.0, %v742
      %v744 = vpop.f32.mrf.mxu0
      %745 = vmatprep.mubr.f32.mxu0 0.0
      %746 = vmatmul.mubr.f32.gmra.mxu0 %v632
      %v747 = vpop.f32.mrf.mxu0
      %v748 = vadd.f32 0.0, %v747
      %v749 = vpop.f32.mrf.mxu0
      %750 = vmatprep.mubr.f32.mxu0 0.0
      %751 = vmatmul.mubr.f32.gmra.mxu0 %v635
      %v752 = vpop.f32.mrf.mxu0
      %v753 = vadd.f32 0.0, %v752
      %v754 = vpop.f32.mrf.mxu0
      %755 = vmatprep.mubr.f32.mxu0 0.0
      %756 = vmatmul.mubr.f32.gmra.mxu0 %v638
      %v757 = vpop.f32.mrf.mxu0
      %v758 = vadd.f32 0.0, %v757
      %v759 = vpop.f32.mrf.mxu0
      %760 = vmatprep.mubr.f32.mxu0 0.0
      %761 = vmatmul.mubr.f32.gmra.mxu0 %v641
      %v762 = vpop.f32.mrf.mxu0
      %v763 = vadd.f32 0.0, %v762
      %v764 = vpop.f32.mrf.mxu0
      %765 = vmatprep.mubr.f32.mxu0 0.0
      %766 = vmatmul.mubr.f32.gmra.mxu0 %v644
      %v767 = vpop.f32.mrf.mxu0
      %v768 = vadd.f32 0.0, %v767
      %v769 = vpop.f32.mrf.mxu0
      %770 = vmatprep.mubr.f32.mxu0 0.0
      %771 = vmatmul.mubr.f32.gmra.mxu0 %v647
      %v772 = vpop.f32.mrf.mxu0
      %v773 = vadd.f32 0.0, %v772
      %v774 = vpop.f32.mrf.mxu0
      %775 = vmatprep.mubr.f32.mxu0 0.0
      %776 = vmatmul.mubr.f32.gmra.mxu0 %v650
      %v777 = vpop.f32.mrf.mxu0
      %v778 = vadd.f32 0.0, %v777
      %v779 = vpop.f32.mrf.mxu0
      %780 = vmatprep.mubr.f32.mxu0 0.0
      %781 = vmatmul.mubr.f32.gmra.mxu0 %v653
      %v782 = vpop.f32.mrf.mxu0
      %v783 = vadd.f32 0.0, %v782
      %v784 = vpop.f32.mrf.mxu0
      %785 = vmatprep.mubr.f32.mxu0 0.0
      %786 = vmatmul.mubr.f32.gmra.mxu0 %v656
      %v787 = vpop.f32.mrf.mxu0
      %v788 = vadd.f32 0.0, %v787
      %v789 = vpop.f32.mrf.mxu0
      %790 = vmatprep.mubr.f32.mxu0 0.0
      %791 = vmatmul.mubr.f32.gmra.mxu0 %v659
      %v792 = vpop.f32.mrf.mxu0
      %v793 = vadd.f32 0.0, %v792
      %v794 = vpop.f32.mrf.mxu0
      %795 = vmatprep.mubr.f32.mxu0 0.0
      %796 = vmatmul.mubr.f32.gmra.mxu0 %v662
      %v797 = vpop.f32.mrf.mxu0
      %v798 = vadd.f32 0.0, %v797
      %v799 = vpop.f32.mrf.mxu0
      %800 = vmatprep.mubr.f32.mxu0 0.0
      %801 = vmatmul.mubr.f32.gmra.mxu0 %v665
      %v802 = vpop.f32.mrf.mxu0
      %v803 = vadd.f32 0.0, %v802
      %v804 = vpop.f32.mrf.mxu0
      %805 = vmatprep.mubr.f32.mxu0 0.0
      %806 = vmatmul.mubr.f32.gmra.mxu0 %v668
      %v807 = vpop.f32.mrf.mxu0
      %v808 = vadd.f32 0.0, %v807
      %v809 = vpop.f32.mrf.mxu0
      %810 = vmatprep.mubr.f32.mxu0 0.0
      %811 = vmatmul.mubr.f32.gmra.mxu0 %v671
      %v812 = vpop.f32.mrf.mxu0
      %v813 = vadd.f32 0.0, %v812
      %v814 = vpop.f32.mrf.mxu0
      %815 = vmatprep.mubr.f32.mxu0 0.0
      %816 = vmatmul.mubr.f32.gmra.mxu0 %v674
      %v817 = vpop.f32.mrf.mxu0
      %v818 = vadd.f32 0.0, %v817
      %v819 = vpop.f32.mrf.mxu0
      %820 = vdwg.mxu0
      %821 = vst.msk [vmem:[%s175 + $0x80] sm:$0xff] %vm402, %v743
      %822 = vst.msk [vmem:[%s175 + $0x88] sm:$0xff] %vm402, %v748
      %823 = vst.msk [vmem:[%s175 + $0x90] sm:$0xff] %vm402, %v753
      %824 = vst.msk [vmem:[%s175 + $0x98] sm:$0xff] %vm402, %v758
      %825 = vst.msk [vmem:[%s175 + $0xa0] sm:$0xff] %vm402, %v763
      %826 = vst.msk [vmem:[%s175 + $0xa8] sm:$0xff] %vm402, %v768
      %827 = vst.msk [vmem:[%s175 + $0xb0] sm:$0xff] %vm402, %v773
      %828 = vst.msk [vmem:[%s175 + $0xb8] sm:$0xff] %vm402, %v778
      %829 = vst.msk [vmem:[%s175 + $0xc0] sm:$0xff] %vm402, %v783
      %830 = vst.msk [vmem:[%s175 + $0xc8] sm:$0xff] %vm402, %v788
      %831 = vst.msk [vmem:[%s175 + $0xd0] sm:$0xff] %vm402, %v793
      %832 = vst.msk [vmem:[%s175 + $0xd8] sm:$0xff] %vm402, %v798
      %833 = vst.msk [vmem:[%s175 + $0xe0] sm:$0xff] %vm402, %v803
      %834 = vst.msk [vmem:[%s175 + $0xe8] sm:$0xff] %vm402, %v808
      %835 = vst.msk [vmem:[%s175 + $0xf0] sm:$0xff] %vm402, %v813
      %836 = vst.msk [vmem:[%s175 + $0xf8] sm:$0xff] %vm402, %v818
      %s837 = smul.u32 32, %s14
      %p838 = scmp.lt.s32.totalorder %s837, 63
      %s839 = scalar_select %p838, %s837, 63
      %s840 = smul.addr %s839, 8
      %s841 = scalar_lea.vmem %s3, %s840
      // Predicated region
      $region33: #{downsample_c_forward.1} parent=31 // pred_check
        %p842 = pneg %p100
      $region34: #{downsample_c_forward.1} parent=31 // pred_check_branch
        %844 = sbr.rel (%p842) target = $region36
      $region35: #{downsample_c_forward.1} parent=31 // pred_region
        %s845 = smul.u32 32, %s14
      $region36: #{downsample_c_forward.1} parent=31 // pred_fallthru
        _
    $region32: #{downsample_c_forward.1} parent=5 // pred_fallthru
      _
    %p846 = scmp.le.s32.totalorder 2, %s9
    // Predicated region
    $region37: #{downsample_c_forward.1} parent=5 // pred_check
      %p847 = pneg %p846
    $region38: #{downsample_c_forward.1} parent=5 // pred_check_branch
      %849 = sbr.rel (%p847) target = $region40
    $region39: #{downsample_c_forward.1} parent=5 // pred_region
      %s850 = ssub.s32 %s9, 2
      // Predicated region
      $region41: #{downsample_c_forward.1} parent=39 // pred_check
        %p851 = pneg %p106
      $region42: #{downsample_c_forward.1} parent=39 // pred_check_branch
        %853 = sbr.rel (%p851) target = $region44
      $region43: #{downsample_c_forward.1} parent=39 // pred_region
        %s854 = smul.u32 32, %s15
        %p855 = scmp.lt.s32.totalorder %s854, 63
        %s856 = scalar_select %p855, %s854, 63
        %s857 = smul.addr %s856, 8
        %s858 = scalar_lea.vmem %s3, %s857
      $region44: #{downsample_c_forward.1} parent=39 // pred_fallthru
        _
    $region40: #{downsample_c_forward.1} parent=5 // pred_fallthru
      _
  $region6: #{downsample_c_forward.1} parent=0 // loop_footer
    %s13 = sadd.s32 1, %s9
  $region7: #{downsample_c_forward.1} parent=0 // loop_footer_branch
    %8 = sbr.rel target = $region3
  $region8: #{downsample_c_forward.1} parent=0 // loop_exit
    _

</llo_original>
